<compile_context>
chip_gen: v6e
topology: v6e:2x2x1
jax: 0.10.0
libtpu: 0.0.40
codegen_flags: <defaults>
</compile_context>

<pallas_src>
import functools

import jax
import jax.numpy as jnp
from jax.experimental import pallas as pl
from jax.experimental.pallas import tpu as pltpu

LANES = 128
_MiB = 1024 * 1024


def _round_up(a, b):
    return (a + b - 1) // b * b


def _device_kind():
    try:
        return jax.devices()[0].device_kind.lower()
    except Exception:
        return ""


def _num_tensorcores(kind):
    # Dual-TensorCore chips (v7x and megacore v4/v5p); v5e/v6e are single-TC.
    if ("v7" in kind) or ("v4" in kind) or ("v5p" in kind):
        return 2
    return 1


def _mse_partial_kernel(x_ref, y_ref, out_ref, *, steps_per_split, tile_rows,
                        valid_rows, first_masked_block, needs_mask):
    """Accumulate an (8, 128) partial sum of (x - y)^2 for this split."""
    c = pl.program_id(0)  # parallel split (one per TensorCore on dual-TC chips)
    i = pl.program_id(1)  # sequential sweep over row tiles

    @pl.when(i == 0)
    def _():
        out_ref[...] = jnp.zeros_like(out_ref)

    d = x_ref[...].astype(jnp.float32) - y_ref[...].astype(jnp.float32)
    sq = d * d

    def _fold(v):
        # (tile_rows, 128) -> (8, 128): layout-preserving reshape (sublane dim
        # split on an (8,128) boundary) + elementwise adds across vregs (VPU).
        return jnp.sum(v.reshape(tile_rows // 8, 8, LANES), axis=0)

    if needs_mask:
        block_idx = c * steps_per_split + i
        is_edge = block_idx >= first_masked_block

        @pl.when(jnp.logical_not(is_edge))
        def _():
            out_ref[...] += _fold(sq)

        @pl.when(is_edge)
        def _():
            # Mask rows past the real array: the partial last tile and any
            # clamped grid-over-coverage tiles (all their logical rows are
            # >= valid_rows, so they contribute exactly zero).
            row_ids = jax.lax.broadcasted_iota(jnp.int32, sq.shape, 0)
            logical_row = block_idx * tile_rows + row_ids
            out_ref[...] += _fold(jnp.where(logical_row < valid_rows, sq, 0.0))
    else:
        out_ref[...] += _fold(sq)


@jax.jit
def mse_loss(inputs, targets):
    assert inputs.shape == targets.shape, "mse_loss requires matching shapes"
    n_elems = inputs.size
    out_dtype = inputs.dtype

    if n_elems == 0:
        # Matches torch.nn.functional.mse_loss on empty input (NaN).
        return jnp.array(float("nan"), dtype=out_dtype)

    x_flat = inputs.reshape(-1)
    y_flat = targets.reshape(-1)

    # 128-aligned prefix goes through the kernel; the <=127-element tail is a
    # tiny XLA correction (no full-array jnp.pad copies for ragged sizes).
    n_main = (n_elems // LANES) * LANES
    tail = n_elems - n_main

    total = jnp.float32(0.0)

    if n_main:
        rows = n_main // LANES
        if tail:
            # NOTE: this prefix slice may still materialize one copy in front
            # of the custom call; allow_input_fusion could remove it if it
            # shows up in the HLO.
            x2d = x_flat[:n_main].reshape(rows, LANES)
            y2d = y_flat[:n_main].reshape(rows, LANES)
        else:
            x2d = x_flat.reshape(rows, LANES)
            y2d = y_flat.reshape(rows, LANES)

        kind = _device_kind()
        is_v7 = "v7" in kind
        itemsize = int(jnp.dtype(x2d.dtype).itemsize)

        # ~2 MiB per input block per step on v5e/v6e, ~4 MiB on v7x (its HBM
        # is ~2.3x faster so per-step overhead bites harder); rows capped at
        # 8192 so f32 temporaries stay well inside v7x's 64 MiB VMEM.
        target_block_bytes = (4 if is_v7 else 2) * _MiB
        max_tile_rows = min(8192, max(16, target_block_bytes // (LANES * itemsize)))
        tile_rows = int(min(max_tile_rows, _round_up(rows, 16)))
        total_blocks = pl.cdiv(rows, tile_rows)

        # One partial-sum block per TensorCore -- only on dual-TC chips.
        n_split = 2 if (_num_tensorcores(kind) >= 2 and total_blocks >= 2) else 1
        steps_per_split = pl.cdiv(total_blocks, n_split)
        needs_mask = (total_blocks * tile_rows != rows) or (
            n_split * steps_per_split != total_blocks)
        first_masked_block = rows // tile_rows

        def in_map(c, i):
            # Clamp so over-coverage steps never index past the array; their
            # (duplicate) contribution is zeroed by the in-kernel mask.
            return (jnp.minimum(c * steps_per_split + i, total_blocks - 1), 0)

        kernel = functools.partial(
            _mse_partial_kernel,
            steps_per_split=steps_per_split,
            tile_rows=tile_rows,
            valid_rows=rows,
            first_masked_block=first_masked_block,
            needs_mask=needs_mask,
        )

        in_block_bytes = tile_rows * LANES * itemsize
        f32_block_bytes = tile_rows * LANES * 4
        # 2 inputs x 2 pipeline buffers + headroom for in-kernel f32 temps.
        vmem_limit = int(min(
            48 * _MiB,
            max(16 * _MiB, 4 * in_block_bytes + 6 * f32_block_bytes + 4 * _MiB)))

        cost = pl.CostEstimate(
            flops=3 * rows * LANES,
            transcendentals=0,
            bytes_accessed=2 * rows * LANES * itemsize + n_split * 8 * LANES * 4,
        )

        partials = pl.pallas_call(
            kernel,
            out_shape=jax.ShapeDtypeStruct((n_split * 8, LANES), jnp.float32),
            grid_spec=pltpu.PrefetchScalarGridSpec(
                num_scalar_prefetch=0,
                grid=(n_split, steps_per_split),
                in_specs=[
                    pl.BlockSpec((tile_rows, LANES), in_map),
                    pl.BlockSpec((tile_rows, LANES), in_map),
                ],
                out_specs=pl.BlockSpec((8, LANES), lambda c, i: (c, 0)),
            ),
            # TODO(synk): verify the leading "parallel" axis really shards the
            # two v7x TensorCores (xprof per-core trace); switch that axis to
            # pltpu.CORE_PARALLEL / an explicit core split if it does not.
            compiler_params=pltpu.CompilerParams(
                dimension_semantics=("parallel", "arbitrary"),
                vmem_limit_bytes=vmem_limit,
            ),
            cost_estimate=cost,
        )(x2d, y2d)

        total = total + jnp.sum(partials, dtype=jnp.float32)

    if tail:
        xt = x_flat[n_main:].astype(jnp.float32)
        yt = y_flat[n_main:].astype(jnp.float32)
        dt = xt - yt
        total = total + jnp.sum(dt * dt)

    # mean reduction (F.mse_loss default).
    return (total / jnp.float32(n_elems)).astype(out_dtype)


if __name__ == "__main__":
    key = jax.random.PRNGKey(0)
    k1, k2 = jax.random.split(key)

    # Primary small case, NCHW like the PyTorch module.
    shape = (2, 4, 16, 16)
    inputs = jax.random.normal(k1, shape, dtype=jnp.float32)
    targets = jax.random.normal(k2, shape, dtype=jnp.float32)
    loss = mse_loss(inputs, targets)
    jax.block_until_ready(loss)
    ref = jnp.mean((inputs - targets) ** 2)
    assert jnp.allclose(loss, ref, rtol=1e-5, atol=1e-6), (loss, ref)

    # Non-128-divisible size: exercises the aligned-prefix path, in-kernel
    # tail-row mask, and the tiny XLA tail correction (no jnp.pad copies).
    k3, k4 = jax.random.split(k1)
    a = jax.random.normal(k3, (3, 5, 37, 29), dtype=jnp.float32)
    b = jax.random.normal(k4, (3, 5, 37, 29), dtype=jnp.float32)
    loss2 = mse_loss(a, b)
    jax.block_until_ready(loss2)
    ref2 = jnp.mean((a - b) ** 2)
    assert jnp.allclose(loss2, ref2, rtol=1e-5, atol=1e-6), (loss2, ref2)

    # Larger multi-row case: exercises the (8,128) in-kernel fold and (on
    # dual-TC chips) the parallel split with clamped over-coverage blocks.
    k5, k6 = jax.random.split(k2)
    c = jax.random.normal(k5, (4, 8, 96, 96), dtype=jnp.float32)
    d = jax.random.normal(k6, (4, 8, 96, 96), dtype=jnp.float32)
    loss3 = mse_loss(c, d)
    jax.block_until_ready(loss3)
    ref3 = jnp.mean((c - d) ** 2)
    assert jnp.allclose(loss3, ref3, rtol=1e-5, atol=1e-6), (loss3, ref3)

    print("KERNEL_OK")
</pallas_src>

<mosaic_0001>
module attributes {stable_mosaic.version = 11 : i64} {
  func.func @_mse_partial_kernel(%arg0: i32, %arg1: i32, %arg2: memref<16x128xf32, #tpu.memory_space<vmem>>, %arg3: memref<16x128xf32, #tpu.memory_space<vmem>>, %arg4: memref<8x128xf32, #tpu.memory_space<vmem>>) attributes {dimension_semantics = [#tpu.dimension_semantics<parallel>, #tpu.dimension_semantics<arbitrary>], iteration_bounds = array<i64: 1, 1>, scalar_prefetch = 0 : i64, scratch_operands = 0 : i64, tpu.core_type = #tpu.core_type<tc>, window_params = [{transform_indices = @transform_0, window_bounds = array<i64: 16, 128>}, {transform_indices = @transform_1, window_bounds = array<i64: 16, 128>}, {transform_indices = @transform_2, window_bounds = array<i64: 8, 128>}]} {
    %c0_i32 = arith.constant 0 : i32
    %0 = arith.cmpi eq, %arg1, %c0_i32 : i32
    %1 = arith.extui %0 : i1 to i32
    %c0_i32_0 = arith.constant 0 : i32
    %2 = arith.cmpi ne, %1, %c0_i32_0 : i32
    scf.if %2 {
      %cst_8 = arith.constant 0.000000e+00 : f32
      %12 = vector.broadcast %cst_8 : f32 to vector<8x128xf32>
      %c0_9 = arith.constant 0 : index
      %c0_10 = arith.constant 0 : index
      %13 = vector.load %arg4[%c0_9, %c0_10] : memref<8x128xf32, #tpu.memory_space<vmem>>, vector<8x128xf32>
      tpu.vector_store %arg4[%c0_9, %c0_10], %12 {strides = array<i32>} : memref<8x128xf32, #tpu.memory_space<vmem>>, vector<8x128xf32>,
    } else {
    }
    %c0 = arith.constant 0 : index
    %c0_1 = arith.constant 0 : index
    %3 = vector.load %arg2[%c0, %c0_1] : memref<16x128xf32, #tpu.memory_space<vmem>>, vector<16x128xf32>
    %c0_2 = arith.constant 0 : index
    %c0_3 = arith.constant 0 : index
    %4 = vector.load %arg3[%c0_2, %c0_3] : memref<16x128xf32, #tpu.memory_space<vmem>>, vector<16x128xf32>
    %5 = arith.subf %3, %4 : vector<16x128xf32>
    %6 = arith.mulf %5, %5 : vector<16x128xf32>
    %c0_4 = arith.constant 0 : index
    %c0_5 = arith.constant 0 : index
    %7 = vector.load %arg4[%c0_4, %c0_5] : memref<8x128xf32, #tpu.memory_space<vmem>>, vector<8x128xf32>
    %8 = vector.shape_cast %6 : vector<16x128xf32> to vector<2x8x128xf32>
    %cst = arith.constant dense<0.000000e+00> : vector<8x128xf32>
    %9 = vector.multi_reduction <add>, %8, %cst [0] : vector<2x8x128xf32> to vector<8x128xf32>
    %10 = arith.addf %7, %9 : vector<8x128xf32>
    %c0_6 = arith.constant 0 : index
    %c0_7 = arith.constant 0 : index
    %11 = vector.load %arg4[%c0_6, %c0_7] : memref<8x128xf32, #tpu.memory_space<vmem>>, vector<8x128xf32>
    tpu.vector_store %arg4[%c0_6, %c0_7], %10 {strides = array<i32>} : memref<8x128xf32, #tpu.memory_space<vmem>>, vector<8x128xf32>,
    return
  }
  func.func @transform_0(%arg0: i32, %arg1: i32) -> (i32, i32) {
    %c1_i32 = arith.constant 1 : i32
    %0 = arith.muli %arg0, %c1_i32 : i32
    %1 = arith.addi %0, %arg1 : i32
    %c0_i32 = arith.constant 0 : i32
    %2 = arith.minsi %1, %c0_i32 : i32
    %c0_i32_0 = arith.constant 0 : i32
    %c0_i32_1 = arith.constant 0 : i32
    return %2, %c0_i32_0 : i32, i32
  }
  func.func @transform_1(%arg0: i32, %arg1: i32) -> (i32, i32) {
    %c1_i32 = arith.constant 1 : i32
    %0 = arith.muli %arg0, %c1_i32 : i32
    %1 = arith.addi %0, %arg1 : i32
    %c0_i32 = arith.constant 0 : i32
    %2 = arith.minsi %1, %c0_i32 : i32
    %c0_i32_0 = arith.constant 0 : i32
    %c0_i32_1 = arith.constant 0 : i32
    return %2, %c0_i32_0 : i32, i32
  }
  func.func @transform_2(%arg0: i32, %arg1: i32) -> (i32, i32) {
    %c0_i32 = arith.constant 0 : i32
    %c0_i32_0 = arith.constant 0 : i32
    return %arg0, %c0_i32 : i32, i32
  }
}

</mosaic_0001>

<llo_original>
// kernel: mse_loss.1
$region0: #{mse_loss.1}
  #allocation0 [shape = 'u32[]', space=smem, size = 0x4, offset = 0x4, fixed_abs, tag = 'smem constant byte address 0x4 - core index']
  #allocation1 [shape = 'u32[144,128]{1,0:T(1,128)}', space=vmem, size = 0x12000, scoped, tag = 'internal scratch']
  %s0 = inlined_call_operand.vmem [shape: f32[16,128], index: 0, kind: input, shape index: {}]
  %s1 = inlined_call_operand.vmem [shape: f32[16,128], index: 1, kind: input, shape index: {}]
  %s2 = inlined_call_operand.vmem [shape: f32[8,128], index: 2, kind: output, shape index: {}]
  %s3 = sld [smem:[#allocation0]]
  $region22: #{mse_loss.1} parent=0
    _
  %s5 = ssub.s32 1, %s3
  %s6 = scalar_select 0, %s5, %s3
  // Predicated region
  $region2: #{mse_loss.1} parent=0 // pred_check
    _
  $region3: #{mse_loss.1} parent=0 // pred_check_branch
    %8 = sbr.rel (0) target = $region5
  $region4: #{mse_loss.1} parent=0 // pred_region
    %s9 = sadd.s32 0, 0
    %p10 = scmp.lt.s32.totalorder %s9, 0
    %s11 = scalar_select %p10, %s9, 0
    %s12 = smul.u32 2, %s11
    %p13 = scmp.lt.s32.totalorder %s12, 1
    %s14 = scalar_select %p13, %s12, 1
    %s15 = smul.addr %s14, 8
    %s16 = scalar_lea.vmem %s0, %s15
    %s17 = sadd.s32 0, 0
    %p18 = scmp.lt.s32.totalorder %s17, 0
    %s19 = scalar_select %p18, %s17, 0
    %s20 = smul.u32 2, %s19
  $region5: #{mse_loss.1} parent=0 // pred_fallthru
    _
  // Predicated region
  $region6: #{mse_loss.1} parent=0 // pred_check
    _
  $region7: #{mse_loss.1} parent=0 // pred_check_branch
    %22 = sbr.rel (0) target = $region9
  $region8: #{mse_loss.1} parent=0 // pred_region
    %s23 = sadd.s32 0, 0
    %p24 = scmp.lt.s32.totalorder %s23, 0
    %s25 = scalar_select %p24, %s23, 0
    %s26 = smul.u32 2, %s25
    %p27 = scmp.lt.s32.totalorder %s26, 1
    %s28 = scalar_select %p27, %s26, 1
    %s29 = smul.addr %s28, 8
    %s30 = scalar_lea.vmem %s1, %s29
    %s31 = sadd.s32 0, 0
    %p32 = scmp.lt.s32.totalorder %s31, 0
    %s33 = scalar_select %p32, %s31, 0
    %s34 = smul.u32 2, %s33
  $region9: #{mse_loss.1} parent=0 // pred_fallthru
    _
  %s35 = sadd.s32 0, 0
  %p36 = scmp.lt.s32.totalorder %s35, 0
  %s37 = scalar_select %p36, %s35, 0
  %s38 = smul.u32 2, %s37
  %p39 = scmp.lt.s32.totalorder %s38, 1
  %s40 = scalar_select %p39, %s38, 1
  %s41 = smul.addr %s40, 8
  %s42 = scalar_lea.vmem %s0, %s41
  %s43 = sadd.s32 0, 0
  %p44 = scmp.lt.s32.totalorder %s43, 0
  %s45 = scalar_select %p44, %s43, 0
  %s46 = smul.u32 2, %s45
  %p47 = scmp.lt.s32.totalorder %s46, 1
  %s48 = scalar_select %p47, %s46, 1
  %s49 = smul.addr %s48, 8
  %s50 = scalar_lea.vmem %s1, %s49
  %s51 = sadd.s32 0, 0
  %p52 = scmp.lt.s32.totalorder %s51, 0
  %s53 = scalar_select %p52, %s51, 0
  %s54 = smul.u32 2, %s53
  %p55 = scmp.lt.s32.totalorder %s54, 1
  %s56 = scalar_select %p55, %s54, 1
  %s57 = smul.addr %s56, 8
  %s58 = scalar_lea.vmem %s0, %s57
  %s59 = sadd.s32 0, 0
  %p60 = scmp.lt.s32.totalorder %s59, 0
  %s61 = scalar_select %p60, %s59, 0
  %s62 = smul.u32 2, %s61
  %s63 = sadd.s32 0, 0
  %p64 = scmp.lt.s32.totalorder %s63, 0
  %s65 = scalar_select %p64, %s63, 0
  %s66 = smul.u32 2, %s65
  %p67 = scmp.lt.s32.totalorder %s66, 1
  %s68 = scalar_select %p67, %s66, 1
  %s69 = smul.addr %s68, 8
  %s70 = scalar_lea.vmem %s1, %s69
  %s71 = sadd.s32 0, 0
  %p72 = scmp.lt.s32.totalorder %s71, 0
  %s73 = scalar_select %p72, %s71, 0
  %s74 = smul.u32 2, %s73
  %p75 = scmp.eq.s32.totalorder 0, 0
  // Predicated region
  $region10: #{mse_loss.1} parent=0 // pred_check
    %p76 = pneg %p75
  $region11: #{mse_loss.1} parent=0 // pred_check_branch
    %78 = sbr.rel (%p76) target = $region13
  $region12: #{mse_loss.1} parent=0 // pred_region
    %79 = vst [vmem:[%s2] sm:$0xff] 0.0
  $region13: #{mse_loss.1} parent=0 // pred_fallthru
    _
  %v80 = vld [vmem:[%s58] sm:$0xff]
  %v81 = vld [vmem:[%s58 + $0x8] sm:$0xff]
  %v82 = vld [vmem:[%s70] sm:$0xff]
  %v83 = vld [vmem:[%s70 + $0x8] sm:$0xff]
  %v84 = vsub.f32 %v80, %v82
  %v85 = vsub.f32 %v81, %v83
  %v86 = vmul.f32 %v84, %v84
  %v87 = vmul.f32 %v85, %v85
  %v88 = vld [vmem:[%s2] sm:$0xff]
  %v89 = vadd.f32 %v86, %v87
  %v90 = vadd.f32 %v88, %v89
  %91 = vst [vmem:[%s2] sm:$0xff] %v90
  // Predicated region
  $region14: #{mse_loss.1} parent=0 // pred_check
    _
  $region15: #{mse_loss.1} parent=0 // pred_check_branch
    %93 = sbr.rel (0) target = $region17
  $region16: #{mse_loss.1} parent=0 // pred_region
    _
  $region17: #{mse_loss.1} parent=0 // pred_fallthru
    _
  // Predicated region
  $region18: #{mse_loss.1} parent=0 // pred_check
    _
  $region19: #{mse_loss.1} parent=0 // pred_check_branch
    %95 = sbr.rel (0) target = $region21
  $region20: #{mse_loss.1} parent=0 // pred_region
    _
  $region21: #{mse_loss.1} parent=0 // pred_fallthru
    _

</llo_original>
